<compile_context>
chip_gen: v7x
topology: tpu7x:2x2x1
jax: 0.10.0
libtpu: 0.0.40
codegen_flags: <defaults>
</compile_context>

<pallas_src>
import functools

import jax
import jax.numpy as jnp
from jax.experimental import pallas as pl
from jax.experimental.pallas import tpu as pltpu


def _mdn_kernel(x_ref, o_ref, *, K: int, D: int):
    x = x_ref[...].astype(jnp.float32)

    # Static per-lane segment masks over the logical last dim (== D).
    col = jax.lax.broadcasted_iota(jnp.int32, x.shape, 1)
    is_pi = col < K
    is_exp = (col >= 3 * K) & (col < 5 * K)
    is_tanh = (col >= 5 * K) & (col < 6 * K)
    is_sig = col >= 6 * K

    neg_inf = jnp.float32(-jnp.inf)
    one = jnp.float32(1.0)

    # Row max over the pi lanes only (numerically stable softmax).
    m = jnp.max(jnp.where(is_pi, x, neg_inf), axis=-1, keepdims=True)

    abs_x = jnp.abs(x)
    # Single fused EUP exp pass for every segment:
    #   pi:      exp(x - m)            (<= 1, safe)
    #   std:     exp(x)
    #   tanh:    E = exp(-2|x|) in (0,1], tanh = sign(x)*(1-E)/(1+E)
    #   sigmoid: E = exp(-|x|)  in (0,1], sig  = where(x>=0, 1, E)/(1+E)
    arg = jnp.where(
        is_pi, x - m,
        jnp.where(is_exp, x,
                  jnp.where(is_tanh, -2.0 * abs_x,
                            jnp.where(is_sig, -abs_x, jnp.float32(0.0)))))
    E = jnp.exp(arg)

    # Softmax denominator: narrow (R,1) reciprocal, then VPU broadcast-mul.
    s = jnp.sum(jnp.where(is_pi, E, jnp.float32(0.0)), axis=-1, keepdims=True)
    inv_s = one / s
    pi = E * inv_s

    # Shared full-width reciprocal for the tanh/sigmoid denominators.
    denom = jnp.where(is_tanh | is_sig, one + E, one)
    inv_d = one / denom
    sign_x = jnp.where(x >= 0.0, one, jnp.float32(-1.0))
    tanh_v = sign_x * (one - E) * inv_d
    sig_v = jnp.where(x >= 0.0, inv_d, E * inv_d)

    out = jnp.where(
        is_pi, pi,
        jnp.where(is_exp, E,
                  jnp.where(is_tanh, tanh_v,
                            jnp.where(is_sig, sig_v, x))))

    o_ref[...] = out.astype(o_ref.dtype)


def mixture_density_layer(output, num_mixtures, *, row_tile=4096):
    """Forward pass of MixtureDensityLayer.

    Returns (pi, mu1, mu2, std1, std2, corr, eos_p), matching
    torch.split(output, K, dim=-1) followed by the per-chunk nonlinearities.
    """
    K = int(num_mixtures)
    D = output.shape[-1]
    assert 6 * K < D <= 7 * K, "last dim must yield 7 chunks of split size K"
    lead = output.shape[:-1]

    x2 = output.reshape(-1, D)
    N = x2.shape[0]
    itemsize = jnp.dtype(output.dtype).itemsize
    sub = {4: 8, 2: 16, 1: 32}.get(itemsize, 8)  # min sublane tile for dtype

    if N <= sub:
        tr = N                       # full-extent row block (always legal)
    else:
        tr = min(int(row_tile), N)
        # Ensure >=2 grid steps so both v7x TensorCores get a share of rows.
        if pl.cdiv(N, tr) < 2:
            tr = pl.cdiv(N, 2)
        tr = max(sub, (tr // sub) * sub)   # sublane-aligned; ragged tail is OK
    grid_r = pl.cdiv(N, tr)

    lanes = ((D + 127) // 128) * 128
    cost = pl.CostEstimate(
        flops=12 * N * lanes,
        transcendentals=2 * N * lanes,
        bytes_accessed=2 * N * lanes * itemsize,
    )

    y = pl.pallas_call(
        functools.partial(_mdn_kernel, K=K, D=D),
        out_shape=jax.ShapeDtypeStruct((N, D), output.dtype),
        grid=(grid_r,),
        in_specs=[pl.BlockSpec((tr, D), lambda i: (i, 0))],
        out_specs=pl.BlockSpec((tr, D), lambda i: (i, 0)),
        compiler_params=pltpu.CompilerParams(
            dimension_semantics=("parallel",)),
        cost_estimate=cost,
    )(x2)

    y = y.reshape(*lead, D)
    pi = y[..., 0 * K:1 * K]
    mu1 = y[..., 1 * K:2 * K]
    mu2 = y[..., 2 * K:3 * K]
    std1 = y[..., 3 * K:4 * K]
    std2 = y[..., 4 * K:5 * K]
    corr = y[..., 5 * K:6 * K]
    eos_p = y[..., 6 * K:D]
    return pi, mu1, mu2, std1, std2, corr, eos_p


def _reference(output, K):
    D = output.shape[-1]
    pi_logits = output[..., 0 * K:1 * K]
    mu1 = output[..., 1 * K:2 * K]
    mu2 = output[..., 2 * K:3 * K]
    std_exp1 = output[..., 3 * K:4 * K]
    std_exp2 = output[..., 4 * K:5 * K]
    corr_tanh = output[..., 5 * K:6 * K]
    eos = output[..., 6 * K:D]
    pi = jax.nn.softmax(pi_logits, axis=-1)
    return (pi, mu1, mu2, jnp.exp(std_exp1), jnp.exp(std_exp2),
            jnp.tanh(corr_tanh), jax.nn.sigmoid(eos))


if __name__ == "__main__":
    # Classic handwriting-MDN shape: D = 6*K + 1 (eos is the 1-wide remainder
    # chunk of torch.split(output, K, dim=-1)).
    B, T, K = 2, 8, 20
    D = 6 * K + 1

    key = jax.random.PRNGKey(0)
    x = jax.random.normal(key, (B, T, D), jnp.float32)

    outs = mixture_density_layer(x, K)
    jax.block_until_ready(outs)

    refs = _reference(x, K)
    names = ("pi", "mu1", "mu2", "std1", "std2", "corr", "eos_p")
    for name, got, ref in zip(names, outs, refs):
        assert got.shape == ref.shape, f"{name} shape mismatch: {got.shape} vs {ref.shape}"
        assert jnp.allclose(got, ref, atol=1e-5, rtol=1e-5), f"{name} mismatch"

    print("KERNEL_OK")
</pallas_src>

<mosaic_0001>
module attributes {stable_mosaic.version = 11 : i64} {
  func.func @_mdn_kernel(%arg0: i32, %arg1: memref<8x121xf32, #tpu.memory_space<vmem>>, %arg2: memref<8x121xf32, #tpu.memory_space<vmem>>) attributes {dimension_semantics = [#tpu.dimension_semantics<parallel>], iteration_bounds = array<i64: 2>, scalar_prefetch = 0 : i64, scratch_operands = 0 : i64, tpu.core_type = #tpu.core_type<tc>, window_params = [{transform_indices = @transform_0, window_bounds = array<i64: 8, 121>}, {transform_indices = @transform_1, window_bounds = array<i64: 8, 121>}]} {
    %c0 = arith.constant 0 : index
    %c0_0 = arith.constant 0 : index
    %0 = vector.load %arg1[%c0, %c0_0] : memref<8x121xf32, #tpu.memory_space<vmem>>, vector<8x121xf32>
    %1 = tpu.iota {dimensions = array<i32: 1>} : vector<8x121xi32>
    %c20_i32 = arith.constant 20 : i32
    %2 = vector.broadcast %c20_i32 : i32 to vector<8x121xi32>
    %3 = arith.cmpi slt, %1, %2 : vector<8x121xi32>
    %c60_i32 = arith.constant 60 : i32
    %4 = vector.broadcast %c60_i32 : i32 to vector<8x121xi32>
    %5 = arith.cmpi sge, %1, %4 : vector<8x121xi32>
    %c100_i32 = arith.constant 100 : i32
    %6 = vector.broadcast %c100_i32 : i32 to vector<8x121xi32>
    %7 = arith.cmpi slt, %1, %6 : vector<8x121xi32>
    %8 = arith.andi %5, %7 : vector<8x121xi1>
    %c100_i32_1 = arith.constant 100 : i32
    %9 = vector.broadcast %c100_i32_1 : i32 to vector<8x121xi32>
    %10 = arith.cmpi sge, %1, %9 : vector<8x121xi32>
    %c120_i32 = arith.constant 120 : i32
    %11 = vector.broadcast %c120_i32 : i32 to vector<8x121xi32>
    %12 = arith.cmpi slt, %1, %11 : vector<8x121xi32>
    %13 = arith.andi %10, %12 : vector<8x121xi1>
    %c120_i32_2 = arith.constant 120 : i32
    %14 = vector.broadcast %c120_i32_2 : i32 to vector<8x121xi32>
    %15 = arith.cmpi sge, %1, %14 : vector<8x121xi32>
    %cst = arith.constant 0xFF800000 : f32
    %16 = vector.broadcast %cst : f32 to vector<8x121xf32>
    %17 = arith.select %3, %0, %16 : vector<8x121xi1>, vector<8x121xf32>
    %cst_3 = arith.constant dense<0xFF800000> : vector<8xf32>
    %18 = vector.multi_reduction <maximumf>, %17, %cst_3 [1] : vector<8x121xf32> to vector<8xf32>
    %19 = vector.shape_cast %18 : vector<8xf32> to vector<8x1xf32>
    %20 = math.absf %0 : vector<8x121xf32>
    %21 = vector.broadcast %19 : vector<8x1xf32> to vector<8x121xf32>
    %22 = arith.subf %0, %21 : vector<8x121xf32>
    %cst_4 = arith.constant -2.000000e+00 : f32
    %23 = vector.broadcast %cst_4 : f32 to vector<8x121xf32>
    %24 = arith.mulf %23, %20 : vector<8x121xf32>
    %cst_5 = arith.constant 0.000000e+00 : f32
    %25 = vector.broadcast %cst_5 : f32 to vector<8x121xf32>
    %26 = arith.subf %25, %20 : vector<8x121xf32>
    %cst_6 = arith.constant 0.000000e+00 : f32
    %27 = vector.broadcast %cst_6 : f32 to vector<8x121xf32>
    %28 = arith.select %15, %26, %27 : vector<8x121xi1>, vector<8x121xf32>
    %29 = arith.select %13, %24, %28 : vector<8x121xi1>, vector<8x121xf32>
    %30 = arith.select %8, %0, %29 : vector<8x121xi1>, vector<8x121xf32>
    %31 = arith.select %3, %22, %30 : vector<8x121xi1>, vector<8x121xf32>
    %32 = math.exp %31 : vector<8x121xf32>
    %cst_7 = arith.constant 0.000000e+00 : f32
    %33 = vector.broadcast %cst_7 : f32 to vector<8x121xf32>
    %34 = arith.select %3, %32, %33 : vector<8x121xi1>, vector<8x121xf32>
    %cst_8 = arith.constant dense<0.000000e+00> : vector<8xf32>
    %35 = vector.multi_reduction <add>, %34, %cst_8 [1] : vector<8x121xf32> to vector<8xf32>
    %36 = vector.shape_cast %35 : vector<8xf32> to vector<8x1xf32>
    %cst_9 = arith.constant 1.000000e+00 : f32
    %37 = vector.broadcast %cst_9 : f32 to vector<8x1xf32>
    %38 = arith.divf %37, %36 : vector<8x1xf32>
    %39 = vector.broadcast %38 : vector<8x1xf32> to vector<8x121xf32>
    %40 = arith.mulf %32, %39 : vector<8x121xf32>
    %41 = arith.ori %13, %15 : vector<8x121xi1>
    %cst_10 = arith.constant 1.000000e+00 : f32
    %42 = vector.broadcast %cst_10 : f32 to vector<8x121xf32>
    %43 = arith.addf %42, %32 : vector<8x121xf32>
    %cst_11 = arith.constant 1.000000e+00 : f32
    %44 = vector.broadcast %cst_11 : f32 to vector<8x121xf32>
    %45 = arith.select %41, %43, %44 : vector<8x121xi1>, vector<8x121xf32>
    %cst_12 = arith.constant 1.000000e+00 : f32
    %46 = vector.broadcast %cst_12 : f32 to vector<8x121xf32>
    %47 = arith.divf %46, %45 : vector<8x121xf32>
    %cst_13 = arith.constant 0.000000e+00 : f32
    %48 = vector.broadcast %cst_13 : f32 to vector<8x121xf32>
    %49 = arith.cmpf oge, %0, %48 : vector<8x121xf32>
    %cst_14 = arith.constant 1.000000e+00 : f32
    %cst_15 = arith.constant -1.000000e+00 : f32
    %50 = vector.broadcast %cst_14 : f32 to vector<8x121xf32>
    %51 = vector.broadcast %cst_15 : f32 to vector<8x121xf32>
    %52 = arith.select %49, %50, %51 : vector<8x121xi1>, vector<8x121xf32>
    %cst_16 = arith.constant 1.000000e+00 : f32
    %53 = vector.broadcast %cst_16 : f32 to vector<8x121xf32>
    %54 = arith.subf %53, %32 : vector<8x121xf32>
    %55 = arith.mulf %52, %54 : vector<8x121xf32>
    %56 = arith.mulf %55, %47 : vector<8x121xf32>
    %cst_17 = arith.constant 0.000000e+00 : f32
    %57 = vector.broadcast %cst_17 : f32 to vector<8x121xf32>
    %58 = arith.cmpf oge, %0, %57 : vector<8x121xf32>
    %59 = arith.mulf %32, %47 : vector<8x121xf32>
    %60 = arith.select %58, %47, %59 : vector<8x121xi1>, vector<8x121xf32>
    %61 = arith.select %15, %60, %0 : vector<8x121xi1>, vector<8x121xf32>
    %62 = arith.select %13, %56, %61 : vector<8x121xi1>, vector<8x121xf32>
    %63 = arith.select %8, %32, %62 : vector<8x121xi1>, vector<8x121xf32>
    %64 = arith.select %3, %40, %63 : vector<8x121xi1>, vector<8x121xf32>
    %c0_18 = arith.constant 0 : index
    %c0_19 = arith.constant 0 : index
    %65 = vector.load %arg2[%c0_18, %c0_19] : memref<8x121xf32, #tpu.memory_space<vmem>>, vector<8x121xf32>
    tpu.vector_store %arg2[%c0_18, %c0_19], %64 {strides = array<i32>} : memref<8x121xf32, #tpu.memory_space<vmem>>, vector<8x121xf32>,
    return
  }
  func.func @transform_0(%arg0: i32) -> (i32, i32) {
    %c0_i32 = arith.constant 0 : i32
    %c0_i32_0 = arith.constant 0 : i32
    return %arg0, %c0_i32 : i32, i32
  }
  func.func @transform_1(%arg0: i32) -> (i32, i32) {
    %c0_i32 = arith.constant 0 : i32
    %c0_i32_0 = arith.constant 0 : i32
    return %arg0, %c0_i32 : i32, i32
  }
}

</mosaic_0001>

<llo_original>
// kernel: tpu_custom_call.1
$region0: #{tpu_custom_call.1}
  #allocation0 [shape = 'u32[]', space=smem, size = 0x4, offset = 0x4, fixed_abs, tag = 'smem constant byte address 0x4 - core index']
  #allocation1 [shape = 'u32[144,128]{1,0:T(1,128)}', space=vmem, size = 0x12000, scoped, tag = 'internal scratch']
  %s0 = inlined_call_operand.hbm [shape: f32[16,121], index: 0, kind: input, shape index: {}]
  %s1 = inlined_call_operand.hbm [shape: f32[16,121], index: 1, kind: output, shape index: {}]
  %s2 = sld [smem:[#allocation0]]
  $region41: #{tpu_custom_call.1} parent=0
    _
  %s4 = ssub.s32 1, %s2
  %s5 = scalar_select 0, %s4, %s2
  $region1: #{tpu_custom_call.1} parent=0
    #allocation2 [shape = 'u8[8192]{0}', space=vmem, size = 0x2000, scoped, tag = 'input window, operand 0']
    #allocation3 [shape = 's32[2]{0}', space=sflag, size = 0x8, scoped, tag = 'scoped memory for tpu_custom_call.1']
    #allocation4 [shape = 's32[2]{0}', space=sflag, size = 0x8, scoped, tag = 'scoped memory for tpu_custom_call.1']
    #allocation5 [shape = 'u8[8192]{0}', space=vmem, size = 0x2000, scoped, tag = 'output window, operand 0']
    %6 = vsyncpa [#allocation3], 0
    %s7 = scalar_lea.sflag [#allocation3], 1
    %8 = vsyncpa %s7, 0
    %9 = vsyncpa [#allocation4], 0
    %s10 = scalar_lea.sflag [#allocation4], 1
    %11 = vsyncpa %s10, 0
    loop: start=0, step=1, limit=4
    $region2: #{tpu_custom_call.1} parent=1 // loop_pre_header
      _
    $region3: #{tpu_custom_call.1} parent=1 // loop_header
      %s13 = sphi 0, %s17
      %p14 = scmp.ge.s32.totalorder %s13, 4
      %s23 = sphi 0, %s25
      %s26 = sphi 0, %s23
      %s27 = sphi 0, %s26
      %s43 = sphi 0, %s27
      %s49 = sphi 0, %s51
      %s52 = sphi 0, %s49
      %s53 = sphi 0, %s52
      %s69 = sphi 0, %s53
    $region4: #{tpu_custom_call.1} parent=1 // loop_header_branch
      %16 = sbr.rel (%p14) target = $region8
    $region5: #{tpu_custom_call.1} parent=1 // loop_body
      %s18 = ssub.s32 %s13, 1
      %s19 = ssub.s32 %s13, 2
      %s20 = sadd.s32 %s13, 1
      %s21 = ssub.s32 %s13, %s20
      %p22 = scmp.eq.s32.totalorder %s21, 0
      %s24 = sadd.s32 %s23, 1
      %s25 = scalar_select %p22, %s23, %s24
      %p28 = pneg %p22
      %p29 = scmp.eq.s32.totalorder %s13, 1
      %p30 = por %p28, %p29
      %p31 = scmp.ne.s32.totalorder %s23, %s26
      %p32 = scmp.eq.s32.totalorder %s13, 0
      %p33 = por %p31, %p32
      %p34 = scmp.ne.s32.totalorder %s23, %s26
      %p35 = scmp.eq.s32.totalorder %s18, 1
      %p36 = por %p34, %p35
      %p37 = scmp.ne.s32.totalorder %s26, %s27
      %p38 = scmp.eq.s32.totalorder %s18, 0
      %p39 = por %p37, %p38
      %p40 = scmp.ne.s32.totalorder %s26, %s27
      %p41 = scmp.eq.s32.totalorder %s19, 1
      %p42 = por %p40, %p41
      %p44 = scmp.ne.s32.totalorder %s27, %s43
      %p45 = scmp.eq.s32.totalorder %s19, 0
      %p46 = por %p44, %p45
      %s47 = ssub.s32 %s13, %s20
      %p48 = scmp.eq.s32.totalorder %s47, 0
      %s50 = sadd.s32 %s49, 1
      %s51 = scalar_select %p48, %s49, %s50
      %p54 = pneg %p48
      %p55 = scmp.eq.s32.totalorder %s13, 1
      %p56 = por %p54, %p55
      %p57 = scmp.ne.s32.totalorder %s49, %s52
      %p58 = scmp.eq.s32.totalorder %s13, 0
      %p59 = por %p57, %p58
      %p60 = scmp.ne.s32.totalorder %s49, %s52
      %p61 = scmp.eq.s32.totalorder %s18, 1
      %p62 = por %p60, %p61
      %p63 = scmp.ne.s32.totalorder %s52, %s53
      %p64 = scmp.eq.s32.totalorder %s18, 0
      %p65 = por %p63, %p64
      %p66 = scmp.ne.s32.totalorder %s52, %s53
      %p67 = scmp.eq.s32.totalorder %s19, 1
      %p68 = por %p66, %p67
      %p70 = scmp.ne.s32.totalorder %s53, %s69
      %p71 = scmp.eq.s32.totalorder %s19, 0
      %p72 = por %p70, %p71
      %p73 = scmp.le.s32.totalorder 1, %s13
      %p74 = scmp.lt.s32.totalorder %s13, 3
      %p75 = pnand %p73, %p74
      %p76 = pneg %p75
      // Predicated region
      $region9: #{tpu_custom_call.1} parent=5 // pred_check
        _
      $region10: #{tpu_custom_call.1} parent=5 // pred_check_branch
        %78 = sbr.rel (%p75) target = $region12
      $region11: #{tpu_custom_call.1} parent=5 // pred_region
        %s79 = ssub.s32 %s13, 1
      $region12: #{tpu_custom_call.1} parent=5 // pred_fallthru
        _
      %p80 = scmp.lt.s32.totalorder %s13, 2
      // Predicated region
      $region13: #{tpu_custom_call.1} parent=5 // pred_check
        %p81 = pneg %p80
      $region14: #{tpu_custom_call.1} parent=5 // pred_check_branch
        %83 = sbr.rel (%p81) target = $region16
      $region15: #{tpu_custom_call.1} parent=5 // pred_region
        // Predicated region
        $region17: #{tpu_custom_call.1} parent=15 // pred_check
          %p84 = pneg %p33
        $region18: #{tpu_custom_call.1} parent=15 // pred_check_branch
          %86 = sbr.rel (%p84) target = $region20
        $region19: #{tpu_custom_call.1} parent=15 // pred_region
          %s87 = sand.u32 %s23, 1
          %s88 = scalar_lea.sflag [#allocation3], %s87
          %s89 = sand.u32 %s23, 1
          %s90 = smul.addr %s89, 8
          %s91 = scalar_lea.vmem [#allocation2], %s90
          %s93 = ssub.s32 128, 128
          %94 = vsyncadd %s88, %s93
          %s95 = smul.addr %s13, 128
          %s96 = scalar_lea.hbm %s0, %s95
          %s98 = sshll.u32 %s91, 4
          %s99 = int_to_ptr.vmem [resolvable:$true] %s98
          %101 = dma.hbm_to_vmem [thread:$0]  %s96, 128, %s99, %s88
        $region20: #{tpu_custom_call.1} parent=15 // pred_fallthru
          _
      $region16: #{tpu_custom_call.1} parent=5 // pred_fallthru
        _
      %p102 = scmp.le.s32.totalorder 1, %s13
      %p103 = scmp.lt.s32.totalorder %s13, 3
      %p104 = pnand %p102, %p103
      %p105 = pneg %p104
      // Predicated region
      $region21: #{tpu_custom_call.1} parent=5 // pred_check
        _
      $region22: #{tpu_custom_call.1} parent=5 // pred_check_branch
        %107 = sbr.rel (%p104) target = $region24
      $region23: #{tpu_custom_call.1} parent=5 // pred_region
        %s108 = ssub.s32 %s13, 1
        %s109 = sand.u32 %s26, 1
        %s110 = scalar_lea.sflag [#allocation3], %s109
        %s111 = sand.u32 %s26, 1
        %s112 = smul.addr %s111, 8
        %s113 = scalar_lea.vmem [#allocation2], %s112
        // Predicated region
        $region25: #{tpu_custom_call.1} parent=23 // pred_check
          %p114 = pneg %p39
        $region26: #{tpu_custom_call.1} parent=23 // pred_check_branch
          %116 = sbr.rel (%p114) target = $region28
        $region27: #{tpu_custom_call.1} parent=23 // pred_region
          %117 = dma.done %s110, 128
        $region28: #{tpu_custom_call.1} parent=23 // pred_fallthru
          _
        %s118 = sand.u32 %s26, 1
        %s119 = scalar_lea.sflag [#allocation3], %s118
        %s120 = sand.u32 %s26, 1
        %s121 = smul.addr %s120, 8
        %s122 = scalar_lea.vmem [#allocation2], %s121
        %p123 = pneg %p39
        %p124 = pneg %p36
        %p125 = pneg %p65
        %p126 = pneg %p62
        %s127 = sand.u32 %s52, 1
        %s128 = scalar_lea.sflag [#allocation4], %s127
        %s129 = sand.u32 %s52, 1
        %s130 = smul.addr %s129, 8
        %s131 = scalar_lea.vmem [#allocation5], %s130
        %v132 = vld [vmem:[%s113] sm:$0xff]
        %v133 = vlaneseq
        %v134 = vand.u32 %v133, 127
        %vm135 = vcmp.lt.s32.totalorder %v134, 20
        %vm136 = vcmp.ge.s32.totalorder %v134, 60
        %vm137 = vcmp.lt.s32.totalorder %v134, 100
        %vm138 = vmand %vm136, %vm137
        %vm139 = vcmp.ge.s32.totalorder %v134, 100
        %vm140 = vcmp.lt.s32.totalorder %v134, 120
        %vm141 = vmand %vm139, %vm140
        %vm142 = vcmp.ge.s32.totalorder %v134, 120
        %v143 = vsel %vm135, %v132, -inf
        %vm144 = vcmask 990208
        %v145 = vsel %vm144, %v143, -inf
        %146 = vmax.xlane.f32.xlu0 %v145
        %v147 = vpop.xlane.xlu0 %146
        %v148 = vand.u32 2147483647, %v132
        %v149 = vsub.f32 %v132, %v147
        %v150 = vmul.f32 %v148, -2.0
        %v151 = vsub.f32 0.0, %v148
        %v152 = vsel %vm142, %v151, 0.0
        %v153 = vsel %vm141, %v150, %v152
        %v154 = vsel %vm138, %v132, %v153
        %v155 = vsel %vm135, %v149, %v154
        %v156 = vmul.f32 %v155, 1.442695
        %v157 = vpow.pop %v156
        %v158 = vsel %vm135, %v157, 0.0
        %v159 = vsel %vm144, %v158, 0.0
        %160 = vadd.xlane.f32.xlu0 %v159
        %v161 = vpop.xlane.xlu0 %160
        %v162 = vrcp.pop %v161
        %v163 = vmul.f32 1.0, %v162
        %v164 = vmul.f32 %v157, %v163
        %vm165 = vmor %vm141, %vm142
        %v166 = vadd.f32 %v157, 1.0
        %v167 = vsel %vm165, %v166, 1.0
        %v168 = vrcp.pop %v167
        %v169 = vmul.f32 1.0, %v168
        %vm170 = vcmp.ge.f32.partialorder %v132, 0.0
        %v171 = vsel %vm170, 1.0, -1.0
        %v172 = vsub.f32 1.0, %v157
        %v173 = vmul.f32 %v171, %v172
        %v174 = vmul.f32 %v173, %v169
        %v175 = vmul.f32 %v157, %v169
        %v176 = vsel %vm170, %v169, %v175
        %v177 = vsel %vm142, %v176, %v132
        %v178 = vsel %vm141, %v174, %v177
        %v179 = vsel %vm138, %v157, %v178
        %v180 = vsel %vm135, %v164, %v179
        %181 = vst.msk [vmem:[%s131] sm:$0xff] %vm144, %v180
        %s182 = sand.u32 %s52, 1
        %s183 = scalar_lea.sflag [#allocation4], %s182
        %s184 = sand.u32 %s52, 1
        %s185 = smul.addr %s184, 8
        %s186 = scalar_lea.vmem [#allocation5], %s185
        // Predicated region
        $region29: #{tpu_custom_call.1} parent=23 // pred_check
          %p187 = pneg %p62
        $region30: #{tpu_custom_call.1} parent=23 // pred_check_branch
          %189 = sbr.rel (%p187) target = $region32
        $region31: #{tpu_custom_call.1} parent=23 // pred_region
          %s191 = ssub.s32 128, 128
          %192 = vsyncadd %s183, %s191
          %s193 = smul.addr %s18, 128
          %s194 = scalar_lea.hbm %s1, %s193
          %s196 = sshll.u32 %s186, 4
          %s197 = int_to_ptr.vmem [resolvable:$true] %s196
          %199 = dma.vmem_to_hbm [thread:$0]  %s197, 128, %s194, %s183
        $region32: #{tpu_custom_call.1} parent=23 // pred_fallthru
          _
      $region24: #{tpu_custom_call.1} parent=5 // pred_fallthru
        _
      %p200 = scmp.le.s32.totalorder 2, %s13
      // Predicated region
      $region33: #{tpu_custom_call.1} parent=5 // pred_check
        %p201 = pneg %p200
      $region34: #{tpu_custom_call.1} parent=5 // pred_check_branch
        %203 = sbr.rel (%p201) target = $region36
      $region35: #{tpu_custom_call.1} parent=5 // pred_region
        %s204 = ssub.s32 %s13, 2
        // Predicated region
        $region37: #{tpu_custom_call.1} parent=35 // pred_check
          %p205 = pneg %p68
        $region38: #{tpu_custom_call.1} parent=35 // pred_check_branch
          %207 = sbr.rel (%p205) target = $region40
        $region39: #{tpu_custom_call.1} parent=35 // pred_region
          %s208 = sand.u32 %s53, 1
          %s209 = scalar_lea.sflag [#allocation4], %s208
          %s210 = sand.u32 %s53, 1
          %s211 = smul.addr %s210, 8
          %s212 = scalar_lea.vmem [#allocation5], %s211
          %213 = dma.done %s209, 128
        $region40: #{tpu_custom_call.1} parent=35 // pred_fallthru
          _
      $region36: #{tpu_custom_call.1} parent=5 // pred_fallthru
        _
    $region6: #{tpu_custom_call.1} parent=1 // loop_footer
      %s17 = sadd.s32 1, %s13
    $region7: #{tpu_custom_call.1} parent=1 // loop_footer_branch
      %12 = sbr.rel target = $region3
    $region8: #{tpu_custom_call.1} parent=1 // loop_exit
      _
    %214 = vsyncpa [#allocation3], 1
    %s215 = scalar_lea.sflag [#allocation3], 1
    %216 = vsyncpa %s215, 1
    %217 = vsyncpa [#allocation4], 1
    %s218 = scalar_lea.sflag [#allocation4], 1
    %219 = vsyncpa %s218, 1

</llo_original>
